<compile_context>
chip_gen: v6e
topology: v6e:2x2x1
jax: 0.10.0
libtpu: 0.0.40
codegen_flags: <defaults>
</compile_context>

<pallas_src>
import functools

import jax
import jax.numpy as jnp
from jax.experimental import pallas as pl
from jax.experimental.pallas import tpu as pltpu


def _round_up(x, m):
    return (x + m - 1) // m * m


# --------------------------------------------------------------------------------------
# Kernel: full sequence, recurrent state + packed weights resident in VMEM.
# --------------------------------------------------------------------------------------
def _rnn_seq_kernel(ub_ref,            # SMEM prefetch: (T,) int32 per-step update bound
                    x_ref,             # VMEM: (1, Bp, KP) packed input slab for step t
                    w_ref,             # VMEM: (KP, KP+OP) packed weights (resident)
                    h0_ref,            # VMEM: (Bp, KP) initial hidden slab (resident)
                    out_ref,           # VMEM: (1, Bp, OP) padded log-probs for step t
                    hout_ref,          # VMEM: (Bp, KP) final hidden slab (resident)
                    h_scratch,         # VMEM scratch: (Bp, KP) f32 recurrent state
                    *, I, H, O, KP):
    t = pl.program_id(0)

    @pl.when(t == 0)
    def _():
        h_scratch[...] = h0_ref[...]

    h_prev = h_scratch[...]                            # hidden lives in lanes [I, I+H)
    combined = x_ref[0].astype(jnp.float32) + h_prev   # lanes: x | h | 1(bias) | 0-pad

    # Single packed MXU matmul:
    #   columns [0, KP)      -> new hidden, already in the packed "combined" lane layout
    #   columns [KP, KP+OP)  -> logits (O real lanes, rest zero-weight padding)
    out = jnp.dot(combined.astype(w_ref.dtype), w_ref[...],
                  preferred_element_type=jnp.float32)

    h_new = out[:, :KP]
    logits = out[:, KP:]

    # Masked, numerically-stable log_softmax over the first O (real) lanes.
    lane = jax.lax.broadcasted_iota(jnp.int32, logits.shape, 1)
    masked = jnp.where(lane < O, logits, jnp.float32(-1e30))
    m = jnp.max(masked, axis=1, keepdims=True)
    shifted = masked - m
    lse = jnp.log(jnp.sum(jnp.exp(shifted), axis=1, keepdims=True))
    out_ref[0] = shifted - lse                         # lane-dense (Bp, OP) store

    # update_bound: rows [0, ub) take the new hidden, rows [ub, Bp) keep the old one.
    ub = ub_ref[t]
    row = jax.lax.broadcasted_iota(jnp.int32, h_new.shape, 0)
    h_scratch[...] = jnp.where(row < ub, h_new, h_prev)

    @pl.when(t == pl.num_programs(0) - 1)
    def _():
        hout_ref[...] = h_scratch[...]


# --------------------------------------------------------------------------------------
# One-time weight packing (hoisted out of the per-call path).
# --------------------------------------------------------------------------------------
def pack_rnn_params(w_i2h, b_i2h, w_i2o, b_i2o, input_size, hidden_size,
                    dtype=jnp.float32):
    """Pack PyTorch-layout weights into a single padded (KP, KP+OP) matrix.

    Row layout of the K (combined) axis:   [ x (I) | h (H) | 1 (bias) | zero pad ]
    Column layout of the N axis:           [ hidden slab (KP lanes) | logits (OP lanes) ]
    The i2h columns are placed at [I, I+H) so the matmul output's first KP lanes are
    directly the next step's hidden slab (no lane shuffling in the kernel).
    """
    I, H = input_size, hidden_size
    O = w_i2o.shape[0]
    assert w_i2h.shape == (H, I + H) and w_i2o.shape == (O, I + H)
    KP = _round_up(I + H + 1, 128)
    OP = _round_up(O, 128)
    Wp = jnp.zeros((KP, KP + OP), dtype)
    Wp = Wp.at[: I + H, I:I + H].set(w_i2h.T.astype(dtype))      # i2h weights
    Wp = Wp.at[I + H, I:I + H].set(b_i2h.astype(dtype))          # i2h bias (via 1-lane)
    Wp = Wp.at[: I + H, KP:KP + O].set(w_i2o.T.astype(dtype))    # i2o weights
    Wp = Wp.at[I + H, KP:KP + O].set(b_i2o.astype(dtype))        # i2o bias
    return Wp


# --------------------------------------------------------------------------------------
# Wrappers.
# --------------------------------------------------------------------------------------
@functools.partial(jax.jit,
                   static_argnames=("input_size", "hidden_size", "output_size"))
def _rnn_sequence_call(x_seq, h0, w_packed, ub, *,
                       input_size, hidden_size, output_size):
    I, H, O = input_size, hidden_size, output_size
    T, B, _ = x_seq.shape
    KP, NP = w_packed.shape
    OP = NP - KP
    Bp = _round_up(B, 8)

    # Build the padded "combined"-layout input slab once (glue, outside the kernel).
    x_slab = jnp.zeros((T, Bp, KP), jnp.float32)
    x_slab = x_slab.at[:, :B, :I].set(x_seq.astype(jnp.float32))
    x_slab = x_slab.at[:, :, I + H].set(1.0)                       # constant bias lane

    h0_slab = jnp.zeros((Bp, KP), jnp.float32)
    h0_slab = h0_slab.at[:B, I:I + H].set(h0.astype(jnp.float32))

    kernel = functools.partial(_rnn_seq_kernel, I=I, H=H, O=O, KP=KP)

    grid_spec = pltpu.PrefetchScalarGridSpec(
        num_scalar_prefetch=1,                 # per-step update_bound table in SMEM
        grid=(T,),
        in_specs=[
            pl.BlockSpec((1, Bp, KP), lambda t, ub_ref: (t, 0, 0)),   # x_t: streamed
            pl.BlockSpec((KP, NP), lambda t, ub_ref: (0, 0)),         # weights: resident
            pl.BlockSpec((Bp, KP), lambda t, ub_ref: (0, 0)),         # h0: resident
        ],
        out_specs=(
            pl.BlockSpec((1, Bp, OP), lambda t, ub_ref: (t, 0, 0)),   # lane-dense output
            pl.BlockSpec((Bp, KP), lambda t, ub_ref: (0, 0)),         # final hidden slab
        ),
        scratch_shapes=[pltpu.VMEM((Bp, KP), jnp.float32)],           # recurrent state
    )

    out_padded, h_final_slab = pl.pallas_call(
        kernel,
        grid_spec=grid_spec,
        out_shape=(jax.ShapeDtypeStruct((T, Bp, OP), jnp.float32),
                   jax.ShapeDtypeStruct((Bp, KP), jnp.float32)),
        compiler_params=pltpu.CompilerParams(
            dimension_semantics=("arbitrary",)),   # time axis is a true recurrence
    )(ub, x_slab, w_packed, h0_slab)

    return out_padded[:, :B, :O], h_final_slab[:B, I:I + H]


def rnn_forward_sequence(x_seq, h0, w_packed, *, input_size, hidden_size, output_size,
                         update_bound=None):
    """Run T RNN steps in one fused kernel. x_seq: (T, B, I), h0: (B, H)."""
    T, B, _ = x_seq.shape
    if update_bound is None:
        ub = jnp.full((T,), B, jnp.int32)          # "None" == update all rows
    else:
        ub = jnp.broadcast_to(jnp.asarray(update_bound, jnp.int32), (T,))
    return _rnn_sequence_call(x_seq, h0, w_packed, ub,
                              input_size=input_size, hidden_size=hidden_size,
                              output_size=output_size)


def rnn_forward_step(x, h, w_packed, *, input_size, hidden_size, output_size,
                     update_bound=None):
    """Exactly RNN.forward(input, hidden, update_bound) for a single step."""
    out_seq, h_new = rnn_forward_sequence(
        x[None], h, w_packed, input_size=input_size, hidden_size=hidden_size,
        output_size=output_size, update_bound=update_bound)
    return out_seq[0], h_new


# --------------------------------------------------------------------------------------
# Reference + demo.
# --------------------------------------------------------------------------------------
def _torch_linear_init(key, out_features, in_features):
    """Deterministic init matching nn.Linear default: U(-1/sqrt(fan_in), +1/sqrt(fan_in))."""
    kw, kb = jax.random.split(key)
    bound = 1.0 / jnp.sqrt(jnp.float32(in_features))
    w = jax.random.uniform(kw, (out_features, in_features), jnp.float32, -bound, bound)
    b = jax.random.uniform(kb, (out_features,), jnp.float32, -bound, bound)
    return w, b


def _ref_sequence(x_seq, h0, w_i2h, b_i2h, w_i2o, b_i2o, update_bound=None):
    h = h0
    outs = []
    for t in range(x_seq.shape[0]):
        combined = jnp.concatenate([x_seq[t], h], axis=1)
        h_new = combined @ w_i2h.T + b_i2h
        logits = combined @ w_i2o.T + b_i2o
        outs.append(jax.nn.log_softmax(logits, axis=1))
        if update_bound is None:
            h = h_new
        else:
            h = jnp.concatenate([h_new[:update_bound], h[update_bound:]], axis=0)
    return jnp.stack(outs), h


if __name__ == "__main__":
    B, INPUT_SIZE, HIDDEN, OUTPUT, T = 8, 16, 32, 8, 8

    key = jax.random.PRNGKey(0)
    k_x, k_i2h, k_i2o = jax.random.split(key, 3)

    x_seq = jax.random.normal(k_x, (T, B, INPUT_SIZE), jnp.float32)
    h0 = jnp.zeros((B, HIDDEN), jnp.float32)                      # initHidden

    w_i2h, b_i2h = _torch_linear_init(k_i2h, HIDDEN, INPUT_SIZE + HIDDEN)
    w_i2o, b_i2o = _torch_linear_init(k_i2o, OUTPUT, INPUT_SIZE + HIDDEN)

    # One-time weight packing (use dtype=jnp.bfloat16 here for bf16 MXU on v6e/v7x).
    w_packed = pack_rnn_params(w_i2h, b_i2h, w_i2o, b_i2o, INPUT_SIZE, HIDDEN)

    sizes = dict(input_size=INPUT_SIZE, hidden_size=HIDDEN, output_size=OUTPUT)

    # 1) Full sequence, update_bound=None (all rows update every step).
    out_seq, h_T = rnn_forward_sequence(x_seq, h0, w_packed, **sizes)
    jax.block_until_ready((out_seq, h_T))

    # 2) Full sequence, update_bound=3 each step (only first 3 rows take the new hidden).
    out_seq_b, h_T_b = rnn_forward_sequence(x_seq, h0, w_packed, update_bound=3, **sizes)
    jax.block_until_ready((out_seq_b, h_T_b))

    # 3) Single-step API (mirrors the PyTorch module forward exactly).
    out1, h1 = rnn_forward_step(x_seq[0], h0, w_packed, **sizes)
    jax.block_until_ready((out1, h1))

    # Correctness vs. pure-JAX reference.
    ref_out, ref_h = _ref_sequence(x_seq, h0, w_i2h, b_i2h, w_i2o, b_i2o)
    assert jnp.allclose(out_seq, ref_out, atol=2e-4), "sequence log_softmax mismatch"
    assert jnp.allclose(h_T, ref_h, atol=2e-4), "sequence hidden mismatch"

    ref_out_b, ref_h_b = _ref_sequence(x_seq, h0, w_i2h, b_i2h, w_i2o, b_i2o,
                                       update_bound=3)
    assert jnp.allclose(out_seq_b, ref_out_b, atol=2e-4), "bounded log_softmax mismatch"
    assert jnp.allclose(h_T_b, ref_h_b, atol=2e-4), "bounded hidden mismatch"
    assert jnp.allclose(h_T_b[3:], h0[3:], atol=1e-6), "update_bound rows not preserved"

    assert jnp.allclose(out1, ref_out[0], atol=2e-4), "single-step output mismatch"
    assert jnp.allclose(h1, ref_h if T == 1 else
                        (x_seq[0] @ w_i2h.T[:INPUT_SIZE] + h0 @ w_i2h.T[INPUT_SIZE:] + b_i2h),
                        atol=2e-4), "single-step hidden mismatch"

    print("KERNEL_OK")
</pallas_src>

<mosaic_0001>
module attributes {stable_mosaic.version = 11 : i64} {
  func.func @_rnn_seq_kernel(%arg0: i32, %arg1: memref<8xi32, #tpu.memory_space<smem>>, %arg2: memref<1x8x128xf32, #tpu.memory_space<vmem>>, %arg3: memref<128x256xf32, #tpu.memory_space<vmem>>, %arg4: memref<8x128xf32, #tpu.memory_space<vmem>>, %arg5: memref<1x8x128xf32, #tpu.memory_space<vmem>>, %arg6: memref<8x128xf32, #tpu.memory_space<vmem>>, %arg7: memref<8x128xf32, #tpu.memory_space<vmem>>) attributes {dimension_semantics = [#tpu.dimension_semantics<arbitrary>], iteration_bounds = array<i64: 8>, scalar_prefetch = 1 : i64, scratch_operands = 1 : i64, tpu.core_type = #tpu.core_type<tc>, window_params = [{transform_indices = @transform_0, window_bounds = array<i64: 1, 8, 128>}, {pipeline_mode = #tpu.pipeline_mode<synchronous>, transform_indices = @transform_1, window_bounds = array<i64: 128, 256>}, {pipeline_mode = #tpu.pipeline_mode<synchronous>, transform_indices = @transform_2, window_bounds = array<i64: 8, 128>}, {transform_indices = @transform_3, window_bounds = array<i64: 1, 8, 128>}, {pipeline_mode = #tpu.pipeline_mode<synchronous>, transform_indices = @transform_4, window_bounds = array<i64: 8, 128>}]} {
    %c0_i32 = arith.constant 0 : i32
    %0 = arith.cmpi eq, %arg0, %c0_i32 : i32
    %1 = arith.extui %0 : i1 to i32
    %c0_i32_0 = arith.constant 0 : i32
    %2 = arith.cmpi ne, %1, %c0_i32_0 : i32
    scf.if %2 {
      %c0_16 = arith.constant 0 : index
      %c0_17 = arith.constant 0 : index
      %39 = vector.load %arg4[%c0_16, %c0_17] : memref<8x128xf32, #tpu.memory_space<vmem>>, vector<8x128xf32>
      %c0_18 = arith.constant 0 : index
      %c0_19 = arith.constant 0 : index
      %40 = vector.load %arg7[%c0_18, %c0_19] : memref<8x128xf32, #tpu.memory_space<vmem>>, vector<8x128xf32>
      tpu.vector_store %arg7[%c0_18, %c0_19], %39 {strides = array<i32>} : memref<8x128xf32, #tpu.memory_space<vmem>>, vector<8x128xf32>,
    } else {
    }
    %c0 = arith.constant 0 : index
    %c0_1 = arith.constant 0 : index
    %3 = vector.load %arg7[%c0, %c0_1] : memref<8x128xf32, #tpu.memory_space<vmem>>, vector<8x128xf32>
    %c0_2 = arith.constant 0 : index
    %c0_3 = arith.constant 0 : index
    %c0_4 = arith.constant 0 : index
    %4 = vector.load %arg2[%c0_2, %c0_3, %c0_4] : memref<1x8x128xf32, #tpu.memory_space<vmem>>, vector<1x8x128xf32>
    %5 = vector.shape_cast %4 : vector<1x8x128xf32> to vector<8x128xf32>
    %6 = arith.addf %5, %3 : vector<8x128xf32>
    %c0_5 = arith.constant 0 : index
    %c0_6 = arith.constant 0 : index
    %7 = vector.load %arg3[%c0_5, %c0_6] : memref<128x256xf32, #tpu.memory_space<vmem>>, vector<128x256xf32>
    %cst = arith.constant dense<0.000000e+00> : vector<8x256xf32>
    %8 = tpu.matmul %6, %7, %cst {dimension_numbers = #tpu.dot_dimension_numbers<[1], [0], [0], [1], [0, 0, 1, 1], [], []>} : vector<8x128xf32>, vector<128x256xf32>, vector<8x256xf32> -> vector<8x256xf32>
    %9 = vector.extract_strided_slice %8 {offsets = [0, 0], sizes = [8, 128], strides = [1, 1]} : vector<8x256xf32> to vector<8x128xf32>
    %10 = vector.extract_strided_slice %8 {offsets = [0, 128], sizes = [8, 128], strides = [1, 1]} : vector<8x256xf32> to vector<8x128xf32>
    %11 = tpu.iota {dimensions = array<i32: 1>} : vector<8x128xi32>
    %c8_i32 = arith.constant 8 : i32
    %12 = vector.broadcast %c8_i32 : i32 to vector<8x128xi32>
    %13 = arith.cmpi slt, %11, %12 : vector<8x128xi32>
    %cst_7 = arith.constant -1.000000e+30 : f32
    %14 = vector.broadcast %cst_7 : f32 to vector<8x128xf32>
    %15 = arith.select %13, %10, %14 : vector<8x128xi1>, vector<8x128xf32>
    %cst_8 = arith.constant dense<0xFF800000> : vector<8xf32>
    %16 = vector.multi_reduction <maximumf>, %15, %cst_8 [1] : vector<8x128xf32> to vector<8xf32>
    %17 = vector.shape_cast %16 : vector<8xf32> to vector<8x1xf32>
    %18 = vector.broadcast %17 : vector<8x1xf32> to vector<8x128xf32>
    %19 = arith.subf %15, %18 : vector<8x128xf32>
    %20 = math.exp %19 : vector<8x128xf32>
    %cst_9 = arith.constant dense<0.000000e+00> : vector<8xf32>
    %21 = vector.multi_reduction <add>, %20, %cst_9 [1] : vector<8x128xf32> to vector<8xf32>
    %22 = vector.shape_cast %21 : vector<8xf32> to vector<8x1xf32>
    %23 = math.log %22 : vector<8x1xf32>
    %24 = vector.broadcast %23 : vector<8x1xf32> to vector<8x128xf32>
    %25 = arith.subf %19, %24 : vector<8x128xf32>
    %c0_10 = arith.constant 0 : index
    %c0_11 = arith.constant 0 : index
    %c0_12 = arith.constant 0 : index
    %26 = vector.load %arg5[%c0_10, %c0_11, %c0_12] : memref<1x8x128xf32, #tpu.memory_space<vmem>>, vector<1x8x128xf32>
    %27 = vector.shape_cast %26 : vector<1x8x128xf32> to vector<8x128xf32>
    %28 = vector.shape_cast %25 : vector<8x128xf32> to vector<1x8x128xf32>
    tpu.vector_store %arg5[%c0_10, %c0_11, %c0_12], %28 {strides = array<i32>} : memref<1x8x128xf32, #tpu.memory_space<vmem>>, vector<1x8x128xf32>,
    %29 = arith.index_cast %arg0 : i32 to index
    %30 = memref.load %arg1[%29] : memref<8xi32, #tpu.memory_space<smem>>
    %31 = tpu.iota {dimensions = array<i32: 0>} : vector<8x128xi32>
    %32 = vector.broadcast %30 : i32 to vector<8x128xi32>
    %33 = arith.cmpi slt, %31, %32 : vector<8x128xi32>
    %34 = arith.select %33, %9, %3 : vector<8x128xi1>, vector<8x128xf32>
    %c0_13 = arith.constant 0 : index
    %c0_14 = arith.constant 0 : index
    %35 = vector.load %arg7[%c0_13, %c0_14] : memref<8x128xf32, #tpu.memory_space<vmem>>, vector<8x128xf32>
    tpu.vector_store %arg7[%c0_13, %c0_14], %34 {strides = array<i32>} : memref<8x128xf32, #tpu.memory_space<vmem>>, vector<8x128xf32>,
    %c7_i32 = arith.constant 7 : i32
    %36 = arith.cmpi eq, %arg0, %c7_i32 : i32
    %37 = arith.extui %36 : i1 to i32
    %c0_i32_15 = arith.constant 0 : i32
    %38 = arith.cmpi ne, %37, %c0_i32_15 : i32
    scf.if %38 {
      %c0_16 = arith.constant 0 : index
      %c0_17 = arith.constant 0 : index
      %39 = vector.load %arg7[%c0_16, %c0_17] : memref<8x128xf32, #tpu.memory_space<vmem>>, vector<8x128xf32>
      %c0_18 = arith.constant 0 : index
      %c0_19 = arith.constant 0 : index
      %40 = vector.load %arg6[%c0_18, %c0_19] : memref<8x128xf32, #tpu.memory_space<vmem>>, vector<8x128xf32>
      tpu.vector_store %arg6[%c0_18, %c0_19], %39 {strides = array<i32>} : memref<8x128xf32, #tpu.memory_space<vmem>>, vector<8x128xf32>,
    } else {
    }
    return
  }
  func.func @transform_0(%arg0: i32, %arg1: memref<8xi32, #tpu.memory_space<smem>>) -> (i32, i32, i32) {
    %c0_i32 = arith.constant 0 : i32
    %c0_i32_0 = arith.constant 0 : i32
    %c0_i32_1 = arith.constant 0 : i32
    return %arg0, %c0_i32, %c0_i32_0 : i32, i32, i32
  }
  func.func @transform_1(%arg0: i32, %arg1: memref<8xi32, #tpu.memory_space<smem>>) -> (i32, i32) {
    %c0_i32 = arith.constant 0 : i32
    %c0_i32_0 = arith.constant 0 : i32
    %c0_i32_1 = arith.constant 0 : i32
    return %c0_i32, %c0_i32_0 : i32, i32
  }
  func.func @transform_2(%arg0: i32, %arg1: memref<8xi32, #tpu.memory_space<smem>>) -> (i32, i32) {
    %c0_i32 = arith.constant 0 : i32
    %c0_i32_0 = arith.constant 0 : i32
    %c0_i32_1 = arith.constant 0 : i32
    return %c0_i32, %c0_i32_0 : i32, i32
  }
  func.func @transform_3(%arg0: i32, %arg1: memref<8xi32, #tpu.memory_space<smem>>) -> (i32, i32, i32) {
    %c0_i32 = arith.constant 0 : i32
    %c0_i32_0 = arith.constant 0 : i32
    %c0_i32_1 = arith.constant 0 : i32
    return %arg0, %c0_i32, %c0_i32_0 : i32, i32, i32
  }
  func.func @transform_4(%arg0: i32, %arg1: memref<8xi32, #tpu.memory_space<smem>>) -> (i32, i32) {
    %c0_i32 = arith.constant 0 : i32
    %c0_i32_0 = arith.constant 0 : i32
    %c0_i32_1 = arith.constant 0 : i32
    return %c0_i32, %c0_i32_0 : i32, i32
  }
}

</mosaic_0001>

<llo_original>
// kernel: _rnn_sequence_call.1
$region0: #{_rnn_sequence_call.1}
  #allocation0 [shape = 'u32[]', space=smem, size = 0x4, offset = 0x4, fixed_abs, tag = 'smem constant byte address 0x4 - core index']
  #allocation1 [shape = 'u32[144,128]{1,0:T(1,128)}', space=vmem, size = 0x12000, scoped, tag = 'internal scratch']
  #allocation2 [shape = 'f32[8,128]{1,0:T(8,128)}', space=vmem, size = 0x1000, scoped, tag = 'scratch operand']
  #allocation3 [shape = 's32[1]{0}', space=sflag, size = 0x4, scoped, tag = 'scoped memory for _rnn_sequence_call.1']
  #allocation4 [shape = 'u8[512]{0}', space=smem, size = 0x200, scoped, tag = 'prefetched SMEM operand 0']
  %s0 = inlined_call_operand.vmem [shape: s32[8], index: 0, kind: input, shape index: {}]
  %s1 = inlined_call_operand.vmem [shape: f32[8,8,128], index: 1, kind: input, shape index: {}]
  %s2 = inlined_call_operand.vmem [shape: f32[128,256], index: 2, kind: input, shape index: {}]
  %s3 = inlined_call_operand.vmem [shape: f32[8,128], index: 3, kind: input, shape index: {}]
  %s4 = inlined_call_operand.hbm [shape: f32[8,8,128], index: 4, kind: output, shape index: {0}]
  %s5 = inlined_call_operand.vmem [shape: f32[8,128], index: 5, kind: output, shape index: {1}]
  %6 = xla_tuple %s4, %s5
  %s7 = sld [smem:[#allocation0]]
  $region61: #{_rnn_sequence_call.1} parent=0
    _
  %s9 = ssub.s32 1, %s7
  %s10 = scalar_select 0, %s9, %s7
  %s11 = sshll.u32 %s0, 4
  %s12 = int_to_ptr.vmem [resolvable:$true] %s11
  %14 = dma.vmem_to_smem %s12, 16, [#allocation4], [#allocation3]
  %15 = dma.done [#allocation3], 16
  %16 = sfence
  $region1: #{_rnn_sequence_call.1} parent=0
    #allocation5 [shape = 'u8[8192]{0}', space=vmem, size = 0x2000, scoped, tag = 'output window, operand 0']
    #allocation6 [shape = 's32[2]{0}', space=sflag, size = 0x8, scoped, tag = 'scoped memory for _rnn_sequence_call.1']
    %17 = vsyncpa [#allocation6], 0
    %s18 = scalar_lea.sflag [#allocation6], 1
    %19 = vsyncpa %s18, 0
    loop: start=0, step=1, limit=10
    $region2: #{_rnn_sequence_call.1} parent=1 // loop_pre_header
      _
    $region3: #{_rnn_sequence_call.1} parent=1 // loop_header
      %s21 = sphi 0, %s25
      %p22 = scmp.ge.s32.totalorder %s21, 10
      %s31 = sphi 0, %s33
      %s34 = sphi 0, %s31
      %s35 = sphi 0, %s34
      %s51 = sphi 0, %s35
      %s55 = sphi 0, %s55
      %s57 = sphi 0, %s55
      %s58 = sphi 0, %s57
      %s72 = sphi 0, %s58
      %s76 = sphi 0, %s76
      %s78 = sphi 0, %s76
      %s79 = sphi 0, %s78
      %s93 = sphi 0, %s79
      %s99 = sphi 0, %s101
      %s102 = sphi 0, %s99
      %s103 = sphi 0, %s102
      %s119 = sphi 0, %s103
      %s123 = sphi 0, %s123
      %s125 = sphi 0, %s123
      %s126 = sphi 0, %s125
      %s140 = sphi 0, %s126
    $region4: #{_rnn_sequence_call.1} parent=1 // loop_header_branch
      %24 = sbr.rel (%p22) target = $region8
    $region5: #{_rnn_sequence_call.1} parent=1 // loop_body
      %s26 = ssub.s32 %s21, 1
      %s27 = ssub.s32 %s21, 2
      %s28 = sadd.s32 %s21, 1
      %s29 = ssub.s32 %s21, %s28
      %p30 = scmp.eq.s32.totalorder %s29, 0
      %s32 = sadd.s32 %s31, 1
      %s33 = scalar_select %p30, %s31, %s32
      %p36 = pneg %p30
      %p37 = scmp.eq.s32.totalorder %s21, 7
      %p38 = por %p36, %p37
      %p39 = scmp.ne.s32.totalorder %s31, %s34
      %p40 = scmp.eq.s32.totalorder %s21, 0
      %p41 = por %p39, %p40
      %p42 = scmp.ne.s32.totalorder %s31, %s34
      %p43 = scmp.eq.s32.totalorder %s26, 7
      %p44 = por %p42, %p43
      %p45 = scmp.ne.s32.totalorder %s34, %s35
      %p46 = scmp.eq.s32.totalorder %s26, 0
      %p47 = por %p45, %p46
      %p48 = scmp.ne.s32.totalorder %s34, %s35
      %p49 = scmp.eq.s32.totalorder %s27, 7
      %p50 = por %p48, %p49
      %p52 = scmp.ne.s32.totalorder %s35, %s51
      %p53 = scmp.eq.s32.totalorder %s27, 0
      %p54 = por %p52, %p53
      %s56 = sadd.s32 %s55, 1
      %p59 = scmp.eq.s32.totalorder %s21, 7
      %p60 = scmp.ne.s32.totalorder %s55, %s57
      %p61 = scmp.eq.s32.totalorder %s21, 0
      %p62 = por %p60, %p61
      %p63 = scmp.ne.s32.totalorder %s55, %s57
      %p64 = scmp.eq.s32.totalorder %s26, 7
      %p65 = por %p63, %p64
      %p66 = scmp.ne.s32.totalorder %s57, %s58
      %p67 = scmp.eq.s32.totalorder %s26, 0
      %p68 = por %p66, %p67
      %p69 = scmp.ne.s32.totalorder %s57, %s58
      %p70 = scmp.eq.s32.totalorder %s27, 7
      %p71 = por %p69, %p70
      %p73 = scmp.ne.s32.totalorder %s58, %s72
      %p74 = scmp.eq.s32.totalorder %s27, 0
      %p75 = por %p73, %p74
      %s77 = sadd.s32 %s76, 1
      %p80 = scmp.eq.s32.totalorder %s21, 7
      %p81 = scmp.ne.s32.totalorder %s76, %s78
      %p82 = scmp.eq.s32.totalorder %s21, 0
      %p83 = por %p81, %p82
      %p84 = scmp.ne.s32.totalorder %s76, %s78
      %p85 = scmp.eq.s32.totalorder %s26, 7
      %p86 = por %p84, %p85
      %p87 = scmp.ne.s32.totalorder %s78, %s79
      %p88 = scmp.eq.s32.totalorder %s26, 0
      %p89 = por %p87, %p88
      %p90 = scmp.ne.s32.totalorder %s78, %s79
      %p91 = scmp.eq.s32.totalorder %s27, 7
      %p92 = por %p90, %p91
      %p94 = scmp.ne.s32.totalorder %s79, %s93
      %p95 = scmp.eq.s32.totalorder %s27, 0
      %p96 = por %p94, %p95
      %s97 = ssub.s32 %s21, %s28
      %p98 = scmp.eq.s32.totalorder %s97, 0
      %s100 = sadd.s32 %s99, 1
      %s101 = scalar_select %p98, %s99, %s100
      %p104 = pneg %p98
      %p105 = scmp.eq.s32.totalorder %s21, 7
      %p106 = por %p104, %p105
      %p107 = scmp.ne.s32.totalorder %s99, %s102
      %p108 = scmp.eq.s32.totalorder %s21, 0
      %p109 = por %p107, %p108
      %p110 = scmp.ne.s32.totalorder %s99, %s102
      %p111 = scmp.eq.s32.totalorder %s26, 7
      %p112 = por %p110, %p111
      %p113 = scmp.ne.s32.totalorder %s102, %s103
      %p114 = scmp.eq.s32.totalorder %s26, 0
      %p115 = por %p113, %p114
      %p116 = scmp.ne.s32.totalorder %s102, %s103
      %p117 = scmp.eq.s32.totalorder %s27, 7
      %p118 = por %p116, %p117
      %p120 = scmp.ne.s32.totalorder %s103, %s119
      %p121 = scmp.eq.s32.totalorder %s27, 0
      %p122 = por %p120, %p121
      %s124 = sadd.s32 %s123, 1
      %p127 = scmp.eq.s32.totalorder %s21, 7
      %p128 = scmp.ne.s32.totalorder %s123, %s125
      %p129 = scmp.eq.s32.totalorder %s21, 0
      %p130 = por %p128, %p129
      %p131 = scmp.ne.s32.totalorder %s123, %s125
      %p132 = scmp.eq.s32.totalorder %s26, 7
      %p133 = por %p131, %p132
      %p134 = scmp.ne.s32.totalorder %s125, %s126
      %p135 = scmp.eq.s32.totalorder %s26, 0
      %p136 = por %p134, %p135
      %p137 = scmp.ne.s32.totalorder %s125, %s126
      %p138 = scmp.eq.s32.totalorder %s27, 7
      %p139 = por %p137, %p138
      %p141 = scmp.ne.s32.totalorder %s126, %s140
      %p142 = scmp.eq.s32.totalorder %s27, 0
      %p143 = por %p141, %p142
      %p144 = scmp.le.s32.totalorder 1, %s21
      %p145 = scmp.lt.s32.totalorder %s21, 9
      %p146 = pnand %p144, %p145
      %p147 = pneg %p146
      // Predicated region
      $region9: #{_rnn_sequence_call.1} parent=5 // pred_check
        _
      $region10: #{_rnn_sequence_call.1} parent=5 // pred_check_branch
        %149 = sbr.rel (%p146) target = $region12
      $region11: #{_rnn_sequence_call.1} parent=5 // pred_region
        %s150 = ssub.s32 %s21, 1
        // Predicated region
        $region13: #{_rnn_sequence_call.1} parent=11 // pred_check
          %p151 = pneg %p68
        $region14: #{_rnn_sequence_call.1} parent=11 // pred_check_branch
          %153 = sbr.rel (%p151) target = $region16
        $region15: #{_rnn_sequence_call.1} parent=11 // pred_region
          _
        $region16: #{_rnn_sequence_call.1} parent=11 // pred_fallthru
          _
        // Predicated region
        $region17: #{_rnn_sequence_call.1} parent=11 // pred_check
          %p154 = pneg %p89
        $region18: #{_rnn_sequence_call.1} parent=11 // pred_check_branch
          %156 = sbr.rel (%p154) target = $region20
        $region19: #{_rnn_sequence_call.1} parent=11 // pred_region
          _
        $region20: #{_rnn_sequence_call.1} parent=11 // pred_fallthru
          _
      $region12: #{_rnn_sequence_call.1} parent=5 // pred_fallthru
        _
      %p157 = scmp.lt.s32.totalorder %s21, 8
      // Predicated region
      $region21: #{_rnn_sequence_call.1} parent=5 // pred_check
        %p158 = pneg %p157
      $region22: #{_rnn_sequence_call.1} parent=5 // pred_check_branch
        %160 = sbr.rel (%p158) target = $region24
      $region23: #{_rnn_sequence_call.1} parent=5 // pred_region
        // Predicated region
        $region25: #{_rnn_sequence_call.1} parent=23 // pred_check
          %p161 = pneg %p41
        $region26: #{_rnn_sequence_call.1} parent=23 // pred_check_branch
          %163 = sbr.rel (%p161) target = $region28
        $region27: #{_rnn_sequence_call.1} parent=23 // pred_region
          %p164 = scmp.lt.s32.totalorder %s21, 7
          %s165 = scalar_select %p164, %s21, 7
          %s166 = smul.addr %s165, 8
          %s167 = scalar_lea.vmem %s1, %s166
        $region28: #{_rnn_sequence_call.1} parent=23 // pred_fallthru
          _
      $region24: #{_rnn_sequence_call.1} parent=5 // pred_fallthru
        _
      %p168 = scmp.le.s32.totalorder 1, %s21
      %p169 = scmp.lt.s32.totalorder %s21, 9
      %p170 = pnand %p168, %p169
      %p171 = pneg %p170
      // Predicated region
      $region29: #{_rnn_sequence_call.1} parent=5 // pred_check
        _
      $region30: #{_rnn_sequence_call.1} parent=5 // pred_check_branch
        %173 = sbr.rel (%p170) target = $region32
      $region31: #{_rnn_sequence_call.1} parent=5 // pred_region
        %s174 = ssub.s32 %s21, 1
        %p175 = scmp.lt.s32.totalorder %s26, 7
        %s176 = scalar_select %p175, %s26, 7
        %s177 = smul.addr %s176, 8
        %s178 = scalar_lea.vmem %s1, %s177
        %p179 = pneg %p47
        %p180 = pneg %p44
        %p181 = pneg %p68
        %p182 = pneg %p65
        %p183 = pneg %p89
        %p184 = pneg %p86
        %p185 = pneg %p115
        %p186 = pneg %p112
        %s187 = sand.u32 %s102, 1
        %s188 = scalar_lea.sflag [#allocation6], %s187
        %s189 = sand.u32 %s102, 1
        %s190 = smul.addr %s189, 8
        %s191 = scalar_lea.vmem [#allocation5], %s190
        %p192 = pneg %p136
        %p193 = pneg %p133
        %p194 = scmp.lt.s32.totalorder %s26, 7
        %s195 = scalar_select %p194, %s26, 7
        %s196 = smul.addr %s195, 8
        %s197 = scalar_lea.vmem %s1, %s196
        %p198 = scmp.eq.s32.totalorder %s26, 0
        // Predicated region
        $region33: #{_rnn_sequence_call.1} parent=31 // pred_check
          %p199 = pneg %p198
        $region34: #{_rnn_sequence_call.1} parent=31 // pred_check_branch
          %201 = sbr.rel (%p199) target = $region36
        $region35: #{_rnn_sequence_call.1} parent=31 // pred_region
          %v202 = vld [vmem:[%s3] sm:$0xff]
          %203 = vst [vmem:[#allocation2] sm:$0xff] %v202
        $region36: #{_rnn_sequence_call.1} parent=31 // pred_fallthru
          _
        %v204 = vld [vmem:[#allocation2] sm:$0xff]
        %v205 = vld [vmem:[%s197] sm:$0xff]
        %v206 = vadd.f32 %v205, %v204
        %v207 = vld [vmem:[%s2] sm:$0xff]
        %v208 = vld [vmem:[%s2 + $0x8] sm:$0xff]
        %v209 = vld [vmem:[%s2 + $0x10] sm:$0xff]
        %v210 = vld [vmem:[%s2 + $0x18] sm:$0xff]
        %v211 = vld [vmem:[%s2 + $0x20] sm:$0xff]
        %v212 = vld [vmem:[%s2 + $0x28] sm:$0xff]
        %v213 = vld [vmem:[%s2 + $0x30] sm:$0xff]
        %v214 = vld [vmem:[%s2 + $0x38] sm:$0xff]
        %v215 = vld [vmem:[%s2 + $0x40] sm:$0xff]
        %v216 = vld [vmem:[%s2 + $0x48] sm:$0xff]
        %v217 = vld [vmem:[%s2 + $0x50] sm:$0xff]
        %v218 = vld [vmem:[%s2 + $0x58] sm:$0xff]
        %v219 = vld [vmem:[%s2 + $0x60] sm:$0xff]
        %v220 = vld [vmem:[%s2 + $0x68] sm:$0xff]
        %v221 = vld [vmem:[%s2 + $0x70] sm:$0xff]
        %v222 = vld [vmem:[%s2 + $0x78] sm:$0xff]
        %v223 = vld [vmem:[%s2 + $0x80] sm:$0xff]
        %v224 = vld [vmem:[%s2 + $0x88] sm:$0xff]
        %v225 = vld [vmem:[%s2 + $0x90] sm:$0xff]
        %v226 = vld [vmem:[%s2 + $0x98] sm:$0xff]
        %v227 = vld [vmem:[%s2 + $0xa0] sm:$0xff]
        %v228 = vld [vmem:[%s2 + $0xa8] sm:$0xff]
        %v229 = vld [vmem:[%s2 + $0xb0] sm:$0xff]
        %v230 = vld [vmem:[%s2 + $0xb8] sm:$0xff]
        %v231 = vld [vmem:[%s2 + $0xc0] sm:$0xff]
        %v232 = vld [vmem:[%s2 + $0xc8] sm:$0xff]
        %v233 = vld [vmem:[%s2 + $0xd0] sm:$0xff]
        %v234 = vld [vmem:[%s2 + $0xd8] sm:$0xff]
        %v235 = vld [vmem:[%s2 + $0xe0] sm:$0xff]
        %v236 = vld [vmem:[%s2 + $0xe8] sm:$0xff]
        %v237 = vld [vmem:[%s2 + $0xf0] sm:$0xff]
        %v238 = vld [vmem:[%s2 + $0xf8] sm:$0xff]
        %239 = vmatprep.subr.mxu0 %v238
        %240 = vmatpush1.msra.mxu0 %v237
        %241 = vmatprep.subr.mxu0 %v236
        %242 = vmatpush1.msra.mxu0 %v235
        %243 = vmatprep.subr.mxu0 %v234
        %244 = vmatpush1.msra.mxu0 %v233
        %245 = vmatprep.subr.mxu0 %v232
        %246 = vmatpush1.msra.mxu0 %v231
        %247 = vmatprep.subr.mxu0 %v230
        %248 = vmatpush1.msra.mxu0 %v229
        %249 = vmatprep.subr.mxu0 %v228
        %250 = vmatpush1.msra.mxu0 %v227
        %251 = vmatprep.subr.mxu0 %v226
        %252 = vmatpush1.msra.mxu0 %v225
        %253 = vmatprep.subr.mxu0 %v224
        %254 = vmatpush1.msra.mxu0 %v223
        %255 = vmatprep.subr.mxu0 %v222
        %256 = vmatpush1.msra.mxu0 %v221
        %257 = vmatprep.subr.mxu0 %v220
        %258 = vmatpush1.msra.mxu0 %v219
        %259 = vmatprep.subr.mxu0 %v218
        %260 = vmatpush1.msra.mxu0 %v217
        %261 = vmatprep.subr.mxu0 %v216
        %262 = vmatpush1.msra.mxu0 %v215
        %263 = vmatprep.subr.mxu0 %v214
        %264 = vmatpush1.msra.mxu0 %v213
        %265 = vmatprep.subr.mxu0 %v212
        %266 = vmatpush1.msra.mxu0 %v211
        %267 = vmatprep.subr.mxu0 %v210
        %268 = vmatpush1.msra.mxu0 %v209
        %269 = vmatprep.subr.mxu0 %v208
        %270 = vmatpush1.msra.mxu0 %v207
        %271 = vmatprep.subr.mxu0 0.0
        %272 = vmatpush2.msra.mxu0 0.0
        %273 = vmatprep.subr.mxu0 0.0
        %274 = vmatpush2.msra.mxu0 0.0
        %275 = vmatprep.subr.mxu0 0.0
        %276 = vmatpush2.msra.mxu0 0.0
        %277 = vmatprep.subr.mxu0 0.0
        %278 = vmatpush2.msra.mxu0 0.0
        %279 = vmatprep.subr.mxu0 0.0
        %280 = vmatpush2.msra.mxu0 0.0
        %281 = vmatprep.subr.mxu0 0.0
        %282 = vmatpush2.msra.mxu0 0.0
        %283 = vmatprep.subr.mxu0 0.0
        %284 = vmatpush2.msra.mxu0 0.0
        %285 = vmatprep.subr.mxu0 0.0
        %286 = vmatpush2.msra.mxu0 0.0
        %287 = vmatprep.subr.mxu0 0.0
        %288 = vmatpush2.msra.mxu0 0.0
        %289 = vmatprep.subr.mxu0 0.0
        %290 = vmatpush2.msra.mxu0 0.0
        %291 = vmatprep.subr.mxu0 0.0
        %292 = vmatpush2.msra.mxu0 0.0
        %293 = vmatprep.subr.mxu0 0.0
        %294 = vmatpush2.msra.mxu0 0.0
        %295 = vmatprep.subr.mxu0 0.0
        %296 = vmatpush2.msra.mxu0 0.0
        %297 = vmatprep.subr.mxu0 0.0
        %298 = vmatpush2.msra.mxu0 0.0
        %299 = vmatprep.subr.mxu0 0.0
        %300 = vmatpush2.msra.mxu0 0.0
        %301 = vmatprep.subr.mxu0 0.0
        %302 = vmatpush2.msra.mxu0 0.0
        %303 = vmatprep.mubr.f32.mxu0 0.0
        %304 = vmatmul.mubr.f32.gmra.mxu0 %v206
        %v305 = vpop.f32.mrf.mxu0
        %v306 = vadd.f32 0.0, %v305
        %v307 = vpop.f32.mrf.mxu0
        %v308 = vadd.f32 0.0, %v307
        %309 = vdwg.mxu0
        %v310 = vlaneseq
        %v311 = vand.u32 %v310, 127
        %vm312 = vcmp.lt.s32.totalorder %v311, 8
        %v313 = vsel %vm312, %v308, -1e+30
        %314 = vmax.xlane.f32.xlu0 %v313
        %v315 = vpop.xlane.xlu0 %314
        %v316 = vsub.f32 %v313, %v315
        %v317 = vmul.f32 %v316, 1.442695
        %v318 = vpow.pop %v317
        %319 = vadd.xlane.f32.xlu0 %v318
        %v320 = vpop.xlane.xlu0 %319
        %v321 = vlog2.pop %v320
        %v322 = vmul.f32 %v321, 0.6931472
        %v323 = vsub.f32 %v316, %v322
        %324 = vst [vmem:[%s191] sm:$0xff] %v323
        %s325 = sld [smem:[#allocation4 + %s26]]
        %v326 = vlaneseq
        %v327 = vshrl.u32 %v326, 7
        %v328 = vstv %s325
        %vm329 = vcmp.lt.s32.totalorder %v327, %v328
        %v330 = vsel %vm329, %v306, %v204
        %331 = vst [vmem:[#allocation2] sm:$0xff] %v330
        %p332 = scmp.eq.s32.totalorder %s26, 7
        // Predicated region
        $region37: #{_rnn_sequence_call.1} parent=31 // pred_check
          %p333 = pneg %p332
        $region38: #{_rnn_sequence_call.1} parent=31 // pred_check_branch
          %335 = sbr.rel (%p333) target = $region40
        $region39: #{_rnn_sequence_call.1} parent=31 // pred_region
          %v336 = vld [vmem:[#allocation2] sm:$0xff]
          %337 = vst [vmem:[%s5] sm:$0xff] %v336
        $region40: #{_rnn_sequence_call.1} parent=31 // pred_fallthru
          _
        %s338 = sand.u32 %s102, 1
        %s339 = scalar_lea.sflag [#allocation6], %s338
        %s340 = sand.u32 %s102, 1
        %s341 = smul.addr %s340, 8
        %s342 = scalar_lea.vmem [#allocation5], %s341
        // Predicated region
        $region41: #{_rnn_sequence_call.1} parent=31 // pred_check
          %p343 = pneg %p112
        $region42: #{_rnn_sequence_call.1} parent=31 // pred_check_branch
          %345 = sbr.rel (%p343) target = $region44
        $region43: #{_rnn_sequence_call.1} parent=31 // pred_region
          %s347 = ssub.s32 128, 128
          %348 = vsyncadd %s339, %s347
          %s349 = smul.addr %s26, 128
          %s350 = scalar_lea.hbm %s4, %s349
          %s352 = sshll.u32 %s342, 4
          %s353 = int_to_ptr.vmem [resolvable:$true] %s352
          %355 = dma.vmem_to_hbm [thread:$0]  %s353, 128, %s350, %s339
        $region44: #{_rnn_sequence_call.1} parent=31 // pred_fallthru
          _
        // Predicated region
        $region45: #{_rnn_sequence_call.1} parent=31 // pred_check
          %p356 = pneg %p133
        $region46: #{_rnn_sequence_call.1} parent=31 // pred_check_branch
          %358 = sbr.rel (%p356) target = $region48
        $region47: #{_rnn_sequence_call.1} parent=31 // pred_region
          _
        $region48: #{_rnn_sequence_call.1} parent=31 // pred_fallthru
          _
        // Predicated region
        $region49: #{_rnn_sequence_call.1} parent=31 // pred_check
          %p359 = pneg %p133
        $region50: #{_rnn_sequence_call.1} parent=31 // pred_check_branch
          %361 = sbr.rel (%p359) target = $region52
        $region51: #{_rnn_sequence_call.1} parent=31 // pred_region
          _
        $region52: #{_rnn_sequence_call.1} parent=31 // pred_fallthru
          _
      $region32: #{_rnn_sequence_call.1} parent=5 // pred_fallthru
        _
      %p362 = scmp.le.s32.totalorder 2, %s21
      // Predicated region
      $region53: #{_rnn_sequence_call.1} parent=5 // pred_check
        %p363 = pneg %p362
      $region54: #{_rnn_sequence_call.1} parent=5 // pred_check_branch
        %365 = sbr.rel (%p363) target = $region56
      $region55: #{_rnn_sequence_call.1} parent=5 // pred_region
        %s366 = ssub.s32 %s21, 2
        // Predicated region
        $region57: #{_rnn_sequence_call.1} parent=55 // pred_check
          %p367 = pneg %p118
        $region58: #{_rnn_sequence_call.1} parent=55 // pred_check_branch
          %369 = sbr.rel (%p367) target = $region60
        $region59: #{_rnn_sequence_call.1} parent=55 // pred_region
          %s370 = sand.u32 %s103, 1
          %s371 = scalar_lea.sflag [#allocation6], %s370
          %s372 = sand.u32 %s103, 1
          %s373 = smul.addr %s372, 8
          %s374 = scalar_lea.vmem [#allocation5], %s373
          %375 = dma.done %s371, 128
        $region60: #{_rnn_sequence_call.1} parent=55 // pred_fallthru
          _
      $region56: #{_rnn_sequence_call.1} parent=5 // pred_fallthru
        _
    $region6: #{_rnn_sequence_call.1} parent=1 // loop_footer
      %s25 = sadd.s32 1, %s21
    $region7: #{_rnn_sequence_call.1} parent=1 // loop_footer_branch
      %20 = sbr.rel target = $region3
    $region8: #{_rnn_sequence_call.1} parent=1 // loop_exit
      _
    %376 = vsyncpa [#allocation6], 1
    %s377 = scalar_lea.sflag [#allocation6], 1
    %378 = vsyncpa %s377, 1

</llo_original>
